<compile_context>
chip_gen: v5e
topology: v5e:2x2
jax: 0.10.0
libtpu: 0.0.40
codegen_flags: <defaults>
</compile_context>

<pallas_src>
import functools

import jax
import jax.numpy as jnp
from jax.experimental import pallas as pl
from jax.experimental.pallas import tpu as pltpu


def ae_kernel(x_ref, w1_ref, b1_ref, w2_ref, b2_ref, recon_ref, latent_ref):
    # Encoder: cast the streamed x block to the MXU input dtype (bf16) here,
    # instead of a separate wrapper pass over HBM; accumulate in f32.
    xb = x_ref[...].astype(w1_ref.dtype)
    h = jnp.dot(xb, w1_ref[...], preferred_element_type=jnp.float32)
    y = jax.nn.sigmoid(h + b1_ref[...])                 # f32 epilogue -> EUP
    latent_ref[...] = y.astype(latent_ref.dtype)

    # Decoder: latent re-quantized to bf16 for the MXU (same value the caller
    # observes in the latent output), f32 accumulate, f32 epilogue.
    o = jnp.dot(y.astype(w2_ref.dtype), w2_ref[...],
                preferred_element_type=jnp.float32)
    recon_ref[...] = jax.nn.sigmoid(o + b2_ref[...]).astype(recon_ref.dtype)


def _round_up(n, m):
    return ((n + m - 1) // m) * m


@functools.partial(
    jax.jit,
    static_argnames=("tb", "min_grid_steps", "compute_dtype", "out_dtype"))
def auto_pheno_forward(x, w1, b1, w2, b2, *, tb=4096, min_grid_steps=8,
                       compute_dtype=jnp.bfloat16, out_dtype=jnp.bfloat16):
    """Forward pass of Auto_Pheno.

    x : (B, F)  MinMax-scaled gene expression (values in [0, 1]), any float dtype.
    w1: (F, H)  encoder weight, pre-transposed to (in, out).
    b1: (1, H)  encoder bias.
    w2: (H, F)  decoder weight, pre-transposed to (in, out).
    b2: (1, F)  decoder bias.
    Returns (reconstruction (B, F), latent (B, H)) in `out_dtype`.
    """
    B, F = x.shape
    H = w1.shape[1]

    # Batch tile: multiple of 8 sublanes, capped at tb, and sized so the grid
    # has >= min_grid_steps steps (megacore sharding on v7x + pipelining).
    # No padding of x: the ragged last block is read past-the-end (rows are
    # independent) and its out-of-range output rows are masked on store.
    tb_eff = min(tb, max(8, _round_up(pl.cdiv(B, min_grid_steps), 8)))
    steps = pl.cdiv(B, tb_eff)

    # Weights/biases are tiny (F*H, F, H elements): one-off casts, VMEM resident.
    w1c = w1.astype(compute_dtype)
    w2c = w2.astype(compute_dtype)
    b1f = b1.astype(jnp.float32)
    b2f = b2.astype(jnp.float32)

    out_bytes = jnp.dtype(out_dtype).itemsize
    cmp_bytes = jnp.dtype(compute_dtype).itemsize
    cost = pl.CostEstimate(
        flops=4 * B * F * H,                           # two matmuls
        transcendentals=B * (F + H),                   # sigmoids
        bytes_accessed=(B * F * x.dtype.itemsize       # x (read once, in place)
                        + 2 * F * H * cmp_bytes        # weights
                        + 4 * (F + H)                  # biases
                        + B * (F + H) * out_bytes),    # recon + latent writes
    )

    recon, latent = pl.pallas_call(
        ae_kernel,
        out_shape=(jax.ShapeDtypeStruct((B, F), out_dtype),
                   jax.ShapeDtypeStruct((B, H), out_dtype)),
        grid=(steps,),
        in_specs=[
            pl.BlockSpec((tb_eff, F), lambda i: (i, 0)),   # x: streamed tiles
            pl.BlockSpec((F, H), lambda i: (0, 0)),        # w1: VMEM resident
            pl.BlockSpec((1, H), lambda i: (0, 0)),        # b1: VMEM resident
            pl.BlockSpec((H, F), lambda i: (0, 0)),        # w2: VMEM resident
            pl.BlockSpec((1, F), lambda i: (0, 0)),        # b2: VMEM resident
        ],
        out_specs=(
            pl.BlockSpec((tb_eff, F), lambda i: (i, 0)),   # reconstruction
            pl.BlockSpec((tb_eff, H), lambda i: (i, 0)),   # latent
        ),
        compiler_params=pltpu.CompilerParams(
            dimension_semantics=("parallel",),
            vmem_limit_bytes=32 * 1024 * 1024,
        ),
        cost_estimate=cost,
    )(x, w1c, b1f, w2c, b2f)
    return recon, latent


if __name__ == "__main__":
    # Shapes consistent with the module: a gene module with 64 genes
    # -> input_features = 64, h1 = 64 // 8 = 8; small batch of samples.
    input_features = 64
    h1 = input_features // 8
    batch = 64

    key = jax.random.PRNGKey(0)
    kx, k1, k2, k3, k4 = jax.random.split(key, 5)

    # MinMax-scaled data lives in [0, 1].
    x = jax.random.uniform(kx, (batch, input_features), jnp.float32)

    # PyTorch nn.Linear default init: U[-1/sqrt(fan_in), 1/sqrt(fan_in)];
    # weights stored pre-transposed as (in, out).
    bnd1 = 1.0 / (input_features ** 0.5)
    bnd2 = 1.0 / (h1 ** 0.5)
    w1 = jax.random.uniform(k1, (input_features, h1), jnp.float32, -bnd1, bnd1)
    b1 = jax.random.uniform(k2, (1, h1), jnp.float32, -bnd1, bnd1)
    w2 = jax.random.uniform(k3, (h1, input_features), jnp.float32, -bnd2, bnd2)
    b2 = jax.random.uniform(k4, (1, input_features), jnp.float32, -bnd2, bnd2)

    # min_grid_steps=8 makes this toy batch exercise a multi-step grid
    # (tb_eff=8, 8 grid steps); production batches use tb up to 4096/step.
    recon, latent = auto_pheno_forward(x, w1, b1, w2, b2)
    jax.block_until_ready((recon, latent))

    # Pure-JAX reference mirroring the kernel's bf16 MXU-input quantization.
    f32 = jnp.float32
    hi = jax.lax.Precision.HIGHEST
    xb = x.astype(jnp.bfloat16).astype(f32)
    w1b = w1.astype(jnp.bfloat16).astype(f32)
    w2b = w2.astype(jnp.bfloat16).astype(f32)
    y_ref = jax.nn.sigmoid(jnp.dot(xb, w1b, precision=hi) + b1)
    yb = y_ref.astype(jnp.bfloat16).astype(f32)
    r_ref = jax.nn.sigmoid(jnp.dot(yb, w2b, precision=hi) + b2)

    assert recon.shape == (batch, input_features) and recon.dtype == jnp.bfloat16
    assert latent.shape == (batch, h1) and latent.dtype == jnp.bfloat16
    err_l = float(jnp.max(jnp.abs(latent.astype(f32) - y_ref)))
    err_r = float(jnp.max(jnp.abs(recon.astype(f32) - r_ref)))
    # bf16 output quantization of sigmoid values in [0, 1] is <= ~2e-3 abs.
    assert err_l < 8e-3, f"latent max-abs-err {err_l}"
    assert err_r < 8e-3, f"recon max-abs-err {err_r}"

    print("KERNEL_OK")
</pallas_src>

<mosaic_0001>
module attributes {stable_mosaic.version = 11 : i64} {
  func.func @ae_kernel(%arg0: i32, %arg1: memref<8x64xf32, #tpu.memory_space<vmem>>, %arg2: memref<64x8xbf16, #tpu.memory_space<vmem>>, %arg3: memref<1x8xf32, #tpu.memory_space<vmem>>, %arg4: memref<8x64xbf16, #tpu.memory_space<vmem>>, %arg5: memref<1x64xf32, #tpu.memory_space<vmem>>, %arg6: memref<8x64xbf16, #tpu.memory_space<vmem>>, %arg7: memref<8x8xbf16, #tpu.memory_space<vmem>>) attributes {dimension_semantics = [#tpu.dimension_semantics<parallel>], iteration_bounds = array<i64: 8>, scalar_prefetch = 0 : i64, scratch_operands = 0 : i64, tpu.core_type = #tpu.core_type<tc>, window_params = [{transform_indices = @transform_0, window_bounds = array<i64: 8, 64>}, {pipeline_mode = #tpu.pipeline_mode<synchronous>, transform_indices = @transform_1, window_bounds = array<i64: 64, 8>}, {pipeline_mode = #tpu.pipeline_mode<synchronous>, transform_indices = @transform_2, window_bounds = array<i64: 1, 8>}, {pipeline_mode = #tpu.pipeline_mode<synchronous>, transform_indices = @transform_3, window_bounds = array<i64: 8, 64>}, {pipeline_mode = #tpu.pipeline_mode<synchronous>, transform_indices = @transform_4, window_bounds = array<i64: 1, 64>}, {transform_indices = @transform_5, window_bounds = array<i64: 8, 64>}, {transform_indices = @transform_6, window_bounds = array<i64: 8, 8>}]} {
    %c0 = arith.constant 0 : index
    %c0_0 = arith.constant 0 : index
    %0 = vector.load %arg1[%c0, %c0_0] : memref<8x64xf32, #tpu.memory_space<vmem>>, vector<8x64xf32>
    %1 = arith.truncf %0 : vector<8x64xf32> to vector<8x64xbf16>
    %c0_1 = arith.constant 0 : index
    %c0_2 = arith.constant 0 : index
    %2 = vector.load %arg2[%c0_1, %c0_2] : memref<64x8xbf16, #tpu.memory_space<vmem>>, vector<64x8xbf16>
    %cst = arith.constant dense<0.000000e+00> : vector<8x8xf32>
    %3 = tpu.matmul %1, %2, %cst {dimension_numbers = #tpu.dot_dimension_numbers<[1], [0], [0], [1], [0, 0, 1, 1], [], []>} : vector<8x64xbf16>, vector<64x8xbf16>, vector<8x8xf32> -> vector<8x8xf32>
    %c0_3 = arith.constant 0 : index
    %c0_4 = arith.constant 0 : index
    %4 = vector.load %arg3[%c0_3, %c0_4] : memref<1x8xf32, #tpu.memory_space<vmem>>, vector<1x8xf32>
    %5 = vector.broadcast %4 : vector<1x8xf32> to vector<8x8xf32>
    %6 = arith.addf %3, %5 : vector<8x8xf32>
    %7 = arith.negf %6 : vector<8x8xf32>
    %8 = math.exp %7 : vector<8x8xf32>
    %cst_5 = arith.constant 1.000000e+00 : f32
    %9 = vector.broadcast %cst_5 : f32 to vector<8x8xf32>
    %10 = arith.addf %9, %8 : vector<8x8xf32>
    %11 = arith.divf %9, %10 : vector<8x8xf32>
    %12 = arith.truncf %11 : vector<8x8xf32> to vector<8x8xbf16>
    %c0_6 = arith.constant 0 : index
    %c0_7 = arith.constant 0 : index
    %13 = vector.load %arg7[%c0_6, %c0_7] : memref<8x8xbf16, #tpu.memory_space<vmem>>, vector<8x8xbf16>
    tpu.vector_store %arg7[%c0_6, %c0_7], %12 {strides = array<i32>} : memref<8x8xbf16, #tpu.memory_space<vmem>>, vector<8x8xbf16>,
    %14 = arith.truncf %11 : vector<8x8xf32> to vector<8x8xbf16>
    %c0_8 = arith.constant 0 : index
    %c0_9 = arith.constant 0 : index
    %15 = vector.load %arg4[%c0_8, %c0_9] : memref<8x64xbf16, #tpu.memory_space<vmem>>, vector<8x64xbf16>
    %cst_10 = arith.constant dense<0.000000e+00> : vector<8x64xf32>
    %16 = tpu.matmul %14, %15, %cst_10 {dimension_numbers = #tpu.dot_dimension_numbers<[1], [0], [0], [1], [0, 0, 1, 1], [], []>} : vector<8x8xbf16>, vector<8x64xbf16>, vector<8x64xf32> -> vector<8x64xf32>
    %c0_11 = arith.constant 0 : index
    %c0_12 = arith.constant 0 : index
    %17 = vector.load %arg5[%c0_11, %c0_12] : memref<1x64xf32, #tpu.memory_space<vmem>>, vector<1x64xf32>
    %18 = vector.broadcast %17 : vector<1x64xf32> to vector<8x64xf32>
    %19 = arith.addf %16, %18 : vector<8x64xf32>
    %20 = arith.negf %19 : vector<8x64xf32>
    %21 = math.exp %20 : vector<8x64xf32>
    %cst_13 = arith.constant 1.000000e+00 : f32
    %22 = vector.broadcast %cst_13 : f32 to vector<8x64xf32>
    %23 = arith.addf %22, %21 : vector<8x64xf32>
    %24 = arith.divf %22, %23 : vector<8x64xf32>
    %25 = arith.truncf %24 : vector<8x64xf32> to vector<8x64xbf16>
    %c0_14 = arith.constant 0 : index
    %c0_15 = arith.constant 0 : index
    %26 = vector.load %arg6[%c0_14, %c0_15] : memref<8x64xbf16, #tpu.memory_space<vmem>>, vector<8x64xbf16>
    tpu.vector_store %arg6[%c0_14, %c0_15], %25 {strides = array<i32>} : memref<8x64xbf16, #tpu.memory_space<vmem>>, vector<8x64xbf16>,
    return
  }
  func.func @transform_0(%arg0: i32) -> (i32, i32) {
    %c0_i32 = arith.constant 0 : i32
    %c0_i32_0 = arith.constant 0 : i32
    return %arg0, %c0_i32 : i32, i32
  }
  func.func @transform_1(%arg0: i32) -> (i32, i32) {
    %c0_i32 = arith.constant 0 : i32
    %c0_i32_0 = arith.constant 0 : i32
    %c0_i32_1 = arith.constant 0 : i32
    return %c0_i32, %c0_i32_0 : i32, i32
  }
  func.func @transform_2(%arg0: i32) -> (i32, i32) {
    %c0_i32 = arith.constant 0 : i32
    %c0_i32_0 = arith.constant 0 : i32
    %c0_i32_1 = arith.constant 0 : i32
    return %c0_i32, %c0_i32_0 : i32, i32
  }
  func.func @transform_3(%arg0: i32) -> (i32, i32) {
    %c0_i32 = arith.constant 0 : i32
    %c0_i32_0 = arith.constant 0 : i32
    %c0_i32_1 = arith.constant 0 : i32
    return %c0_i32, %c0_i32_0 : i32, i32
  }
  func.func @transform_4(%arg0: i32) -> (i32, i32) {
    %c0_i32 = arith.constant 0 : i32
    %c0_i32_0 = arith.constant 0 : i32
    %c0_i32_1 = arith.constant 0 : i32
    return %c0_i32, %c0_i32_0 : i32, i32
  }
  func.func @transform_5(%arg0: i32) -> (i32, i32) {
    %c0_i32 = arith.constant 0 : i32
    %c0_i32_0 = arith.constant 0 : i32
    return %arg0, %c0_i32 : i32, i32
  }
  func.func @transform_6(%arg0: i32) -> (i32, i32) {
    %c0_i32 = arith.constant 0 : i32
    %c0_i32_0 = arith.constant 0 : i32
    return %arg0, %c0_i32 : i32, i32
  }
}

</mosaic_0001>

<llo_original>
// kernel: auto_pheno_forward.1
$region0: #{auto_pheno_forward.1}
  #allocation0 [shape = 'u32[]', space=smem, size = 0x4, offset = 0x4, fixed_abs, tag = 'smem constant byte address 0x4 - core index']
  #allocation1 [shape = 'u32[72,128]{1,0:T(1,128)}', space=vmem, size = 0x9000, scoped, tag = 'internal scratch']
  %s0 = inlined_call_operand.hbm [shape: f32[64,64], index: 0, kind: input, shape index: {}]
  %s1 = inlined_call_operand.vmem [shape: bf16[64,8], index: 1, kind: input, shape index: {}]
  %s2 = inlined_call_operand.vmem [shape: f32[1,8], index: 2, kind: input, shape index: {}]
  %s3 = inlined_call_operand.vmem [shape: bf16[8,64], index: 3, kind: input, shape index: {}]
  %s4 = inlined_call_operand.vmem [shape: f32[1,64], index: 4, kind: input, shape index: {}]
  %s5 = inlined_call_operand.hbm [shape: bf16[64,64], index: 5, kind: output, shape index: {0}]
  %s6 = inlined_call_operand.vmem [shape: bf16[64,8], index: 6, kind: output, shape index: {1}]
  %7 = xla_tuple %s5, %s6
  %s8 = sld [smem:[#allocation0]]
  $region65: #{auto_pheno_forward.1} parent=0
    _
  %s10 = ssub.s32 1, %s8
  %s11 = scalar_select 0, %s10, %s8
  $region1: #{auto_pheno_forward.1} parent=0
    #allocation2 [shape = 'u8[8192]{0}', space=vmem, size = 0x2000, scoped, tag = 'input window, operand 0']
    #allocation3 [shape = 's32[2]{0}', space=sflag, size = 0x8, scoped, tag = 'scoped memory for auto_pheno_forward.1']
    #allocation4 [shape = 's32[2]{0}', space=sflag, size = 0x8, scoped, tag = 'scoped memory for auto_pheno_forward.1']
    #allocation5 [shape = 'u8[4096]{0}', space=vmem, size = 0x1000, scoped, tag = 'output window, operand 0']
    %12 = vsyncpa [#allocation3], 0
    %s13 = scalar_lea.sflag [#allocation3], 1
    %14 = vsyncpa %s13, 0
    %15 = vsyncpa [#allocation4], 0
    %s16 = scalar_lea.sflag [#allocation4], 1
    %17 = vsyncpa %s16, 0
    loop: start=0, step=1, limit=10
    $region2: #{auto_pheno_forward.1} parent=1 // loop_pre_header
      _
    $region3: #{auto_pheno_forward.1} parent=1 // loop_header
      %s19 = sphi 0, %s23
      %p20 = scmp.ge.s32.totalorder %s19, 10
      %s29 = sphi 0, %s31
      %s32 = sphi 0, %s29
      %s33 = sphi 0, %s32
      %s49 = sphi 0, %s33
      %s53 = sphi 0, %s53
      %s55 = sphi 0, %s53
      %s56 = sphi 0, %s55
      %s70 = sphi 0, %s56
      %s74 = sphi 0, %s74
      %s76 = sphi 0, %s74
      %s77 = sphi 0, %s76
      %s91 = sphi 0, %s77
      %s95 = sphi 0, %s95
      %s97 = sphi 0, %s95
      %s98 = sphi 0, %s97
      %s112 = sphi 0, %s98
      %s116 = sphi 0, %s116
      %s118 = sphi 0, %s116
      %s119 = sphi 0, %s118
      %s133 = sphi 0, %s119
      %s139 = sphi 0, %s141
      %s142 = sphi 0, %s139
      %s143 = sphi 0, %s142
      %s159 = sphi 0, %s143
      %s165 = sphi 0, %s167
      %s168 = sphi 0, %s165
      %s169 = sphi 0, %s168
      %s185 = sphi 0, %s169
    $region4: #{auto_pheno_forward.1} parent=1 // loop_header_branch
      %22 = sbr.rel (%p20) target = $region8
    $region5: #{auto_pheno_forward.1} parent=1 // loop_body
      %s24 = ssub.s32 %s19, 1
      %s25 = ssub.s32 %s19, 2
      %s26 = sadd.s32 %s19, 1
      %s27 = ssub.s32 %s19, %s26
      %p28 = scmp.eq.s32.totalorder %s27, 0
      %s30 = sadd.s32 %s29, 1
      %s31 = scalar_select %p28, %s29, %s30
      %p34 = pneg %p28
      %p35 = scmp.eq.s32.totalorder %s19, 7
      %p36 = por %p34, %p35
      %p37 = scmp.ne.s32.totalorder %s29, %s32
      %p38 = scmp.eq.s32.totalorder %s19, 0
      %p39 = por %p37, %p38
      %p40 = scmp.ne.s32.totalorder %s29, %s32
      %p41 = scmp.eq.s32.totalorder %s24, 7
      %p42 = por %p40, %p41
      %p43 = scmp.ne.s32.totalorder %s32, %s33
      %p44 = scmp.eq.s32.totalorder %s24, 0
      %p45 = por %p43, %p44
      %p46 = scmp.ne.s32.totalorder %s32, %s33
      %p47 = scmp.eq.s32.totalorder %s25, 7
      %p48 = por %p46, %p47
      %p50 = scmp.ne.s32.totalorder %s33, %s49
      %p51 = scmp.eq.s32.totalorder %s25, 0
      %p52 = por %p50, %p51
      %s54 = sadd.s32 %s53, 1
      %p57 = scmp.eq.s32.totalorder %s19, 7
      %p58 = scmp.ne.s32.totalorder %s53, %s55
      %p59 = scmp.eq.s32.totalorder %s19, 0
      %p60 = por %p58, %p59
      %p61 = scmp.ne.s32.totalorder %s53, %s55
      %p62 = scmp.eq.s32.totalorder %s24, 7
      %p63 = por %p61, %p62
      %p64 = scmp.ne.s32.totalorder %s55, %s56
      %p65 = scmp.eq.s32.totalorder %s24, 0
      %p66 = por %p64, %p65
      %p67 = scmp.ne.s32.totalorder %s55, %s56
      %p68 = scmp.eq.s32.totalorder %s25, 7
      %p69 = por %p67, %p68
      %p71 = scmp.ne.s32.totalorder %s56, %s70
      %p72 = scmp.eq.s32.totalorder %s25, 0
      %p73 = por %p71, %p72
      %s75 = sadd.s32 %s74, 1
      %p78 = scmp.eq.s32.totalorder %s19, 7
      %p79 = scmp.ne.s32.totalorder %s74, %s76
      %p80 = scmp.eq.s32.totalorder %s19, 0
      %p81 = por %p79, %p80
      %p82 = scmp.ne.s32.totalorder %s74, %s76
      %p83 = scmp.eq.s32.totalorder %s24, 7
      %p84 = por %p82, %p83
      %p85 = scmp.ne.s32.totalorder %s76, %s77
      %p86 = scmp.eq.s32.totalorder %s24, 0
      %p87 = por %p85, %p86
      %p88 = scmp.ne.s32.totalorder %s76, %s77
      %p89 = scmp.eq.s32.totalorder %s25, 7
      %p90 = por %p88, %p89
      %p92 = scmp.ne.s32.totalorder %s77, %s91
      %p93 = scmp.eq.s32.totalorder %s25, 0
      %p94 = por %p92, %p93
      %s96 = sadd.s32 %s95, 1
      %p99 = scmp.eq.s32.totalorder %s19, 7
      %p100 = scmp.ne.s32.totalorder %s95, %s97
      %p101 = scmp.eq.s32.totalorder %s19, 0
      %p102 = por %p100, %p101
      %p103 = scmp.ne.s32.totalorder %s95, %s97
      %p104 = scmp.eq.s32.totalorder %s24, 7
      %p105 = por %p103, %p104
      %p106 = scmp.ne.s32.totalorder %s97, %s98
      %p107 = scmp.eq.s32.totalorder %s24, 0
      %p108 = por %p106, %p107
      %p109 = scmp.ne.s32.totalorder %s97, %s98
      %p110 = scmp.eq.s32.totalorder %s25, 7
      %p111 = por %p109, %p110
      %p113 = scmp.ne.s32.totalorder %s98, %s112
      %p114 = scmp.eq.s32.totalorder %s25, 0
      %p115 = por %p113, %p114
      %s117 = sadd.s32 %s116, 1
      %p120 = scmp.eq.s32.totalorder %s19, 7
      %p121 = scmp.ne.s32.totalorder %s116, %s118
      %p122 = scmp.eq.s32.totalorder %s19, 0
      %p123 = por %p121, %p122
      %p124 = scmp.ne.s32.totalorder %s116, %s118
      %p125 = scmp.eq.s32.totalorder %s24, 7
      %p126 = por %p124, %p125
      %p127 = scmp.ne.s32.totalorder %s118, %s119
      %p128 = scmp.eq.s32.totalorder %s24, 0
      %p129 = por %p127, %p128
      %p130 = scmp.ne.s32.totalorder %s118, %s119
      %p131 = scmp.eq.s32.totalorder %s25, 7
      %p132 = por %p130, %p131
      %p134 = scmp.ne.s32.totalorder %s119, %s133
      %p135 = scmp.eq.s32.totalorder %s25, 0
      %p136 = por %p134, %p135
      %s137 = ssub.s32 %s19, %s26
      %p138 = scmp.eq.s32.totalorder %s137, 0
      %s140 = sadd.s32 %s139, 1
      %s141 = scalar_select %p138, %s139, %s140
      %p144 = pneg %p138
      %p145 = scmp.eq.s32.totalorder %s19, 7
      %p146 = por %p144, %p145
      %p147 = scmp.ne.s32.totalorder %s139, %s142
      %p148 = scmp.eq.s32.totalorder %s19, 0
      %p149 = por %p147, %p148
      %p150 = scmp.ne.s32.totalorder %s139, %s142
      %p151 = scmp.eq.s32.totalorder %s24, 7
      %p152 = por %p150, %p151
      %p153 = scmp.ne.s32.totalorder %s142, %s143
      %p154 = scmp.eq.s32.totalorder %s24, 0
      %p155 = por %p153, %p154
      %p156 = scmp.ne.s32.totalorder %s142, %s143
      %p157 = scmp.eq.s32.totalorder %s25, 7
      %p158 = por %p156, %p157
      %p160 = scmp.ne.s32.totalorder %s143, %s159
      %p161 = scmp.eq.s32.totalorder %s25, 0
      %p162 = por %p160, %p161
      %s163 = ssub.s32 %s19, %s26
      %p164 = scmp.eq.s32.totalorder %s163, 0
      %s166 = sadd.s32 %s165, 1
      %s167 = scalar_select %p164, %s165, %s166
      %p170 = pneg %p164
      %p171 = scmp.eq.s32.totalorder %s19, 7
      %p172 = por %p170, %p171
      %p173 = scmp.ne.s32.totalorder %s165, %s168
      %p174 = scmp.eq.s32.totalorder %s19, 0
      %p175 = por %p173, %p174
      %p176 = scmp.ne.s32.totalorder %s165, %s168
      %p177 = scmp.eq.s32.totalorder %s24, 7
      %p178 = por %p176, %p177
      %p179 = scmp.ne.s32.totalorder %s168, %s169
      %p180 = scmp.eq.s32.totalorder %s24, 0
      %p181 = por %p179, %p180
      %p182 = scmp.ne.s32.totalorder %s168, %s169
      %p183 = scmp.eq.s32.totalorder %s25, 7
      %p184 = por %p182, %p183
      %p186 = scmp.ne.s32.totalorder %s169, %s185
      %p187 = scmp.eq.s32.totalorder %s25, 0
      %p188 = por %p186, %p187
      %p189 = scmp.le.s32.totalorder 1, %s19
      %p190 = scmp.lt.s32.totalorder %s19, 9
      %p191 = pnand %p189, %p190
      %p192 = pneg %p191
      // Predicated region
      $region9: #{auto_pheno_forward.1} parent=5 // pred_check
        _
      $region10: #{auto_pheno_forward.1} parent=5 // pred_check_branch
        %194 = sbr.rel (%p191) target = $region12
      $region11: #{auto_pheno_forward.1} parent=5 // pred_region
        %s195 = ssub.s32 %s19, 1
        // Predicated region
        $region13: #{auto_pheno_forward.1} parent=11 // pred_check
          %p196 = pneg %p66
        $region14: #{auto_pheno_forward.1} parent=11 // pred_check_branch
          %198 = sbr.rel (%p196) target = $region16
        $region15: #{auto_pheno_forward.1} parent=11 // pred_region
          _
        $region16: #{auto_pheno_forward.1} parent=11 // pred_fallthru
          _
        // Predicated region
        $region17: #{auto_pheno_forward.1} parent=11 // pred_check
          %p199 = pneg %p87
        $region18: #{auto_pheno_forward.1} parent=11 // pred_check_branch
          %201 = sbr.rel (%p199) target = $region20
        $region19: #{auto_pheno_forward.1} parent=11 // pred_region
          _
        $region20: #{auto_pheno_forward.1} parent=11 // pred_fallthru
          _
        // Predicated region
        $region21: #{auto_pheno_forward.1} parent=11 // pred_check
          %p202 = pneg %p108
        $region22: #{auto_pheno_forward.1} parent=11 // pred_check_branch
          %204 = sbr.rel (%p202) target = $region24
        $region23: #{auto_pheno_forward.1} parent=11 // pred_region
          _
        $region24: #{auto_pheno_forward.1} parent=11 // pred_fallthru
          _
        // Predicated region
        $region25: #{auto_pheno_forward.1} parent=11 // pred_check
          %p205 = pneg %p129
        $region26: #{auto_pheno_forward.1} parent=11 // pred_check_branch
          %207 = sbr.rel (%p205) target = $region28
        $region27: #{auto_pheno_forward.1} parent=11 // pred_region
          _
        $region28: #{auto_pheno_forward.1} parent=11 // pred_fallthru
          _
      $region12: #{auto_pheno_forward.1} parent=5 // pred_fallthru
        _
      %p208 = scmp.lt.s32.totalorder %s19, 8
      // Predicated region
      $region29: #{auto_pheno_forward.1} parent=5 // pred_check
        %p209 = pneg %p208
      $region30: #{auto_pheno_forward.1} parent=5 // pred_check_branch
        %211 = sbr.rel (%p209) target = $region32
      $region31: #{auto_pheno_forward.1} parent=5 // pred_region
        // Predicated region
        $region33: #{auto_pheno_forward.1} parent=31 // pred_check
          %p212 = pneg %p39
        $region34: #{auto_pheno_forward.1} parent=31 // pred_check_branch
          %214 = sbr.rel (%p212) target = $region36
        $region35: #{auto_pheno_forward.1} parent=31 // pred_region
          %s215 = sand.u32 %s29, 1
          %s216 = scalar_lea.sflag [#allocation3], %s215
          %s217 = sand.u32 %s29, 1
          %s218 = smul.addr %s217, 8
          %s219 = scalar_lea.vmem [#allocation2], %s218
          %221 = vsyncadd %s216, 0
          %s222 = smul.addr %s19, 8
          %s223 = scalar_lea.hbm %s0, %s222
          %s225 = sshll.u32 %s223, 4
          %s226 = int_to_ptr.hbm [resolvable:$true] %s225
          %s227 = sshll.u32 %s219, 4
          %s228 = int_to_ptr.vmem [resolvable:$true] %s227
          %230 = dma.hbm_to_vmem [thread:$0]  %s226, 128, %s228, %s216
        $region36: #{auto_pheno_forward.1} parent=31 // pred_fallthru
          _
      $region32: #{auto_pheno_forward.1} parent=5 // pred_fallthru
        _
      %p231 = scmp.le.s32.totalorder 1, %s19
      %p232 = scmp.lt.s32.totalorder %s19, 9
      %p233 = pnand %p231, %p232
      %p234 = pneg %p233
      // Predicated region
      $region37: #{auto_pheno_forward.1} parent=5 // pred_check
        _
      $region38: #{auto_pheno_forward.1} parent=5 // pred_check_branch
        %236 = sbr.rel (%p233) target = $region40
      $region39: #{auto_pheno_forward.1} parent=5 // pred_region
        %s237 = ssub.s32 %s19, 1
        %s238 = sand.u32 %s32, 1
        %s239 = scalar_lea.sflag [#allocation3], %s238
        %s240 = sand.u32 %s32, 1
        %s241 = smul.addr %s240, 8
        %s242 = scalar_lea.vmem [#allocation2], %s241
        // Predicated region
        $region41: #{auto_pheno_forward.1} parent=39 // pred_check
          %p243 = pneg %p45
        $region42: #{auto_pheno_forward.1} parent=39 // pred_check_branch
          %245 = sbr.rel (%p243) target = $region44
        $region43: #{auto_pheno_forward.1} parent=39 // pred_region
          %247 = dma.done %s239, 128
        $region44: #{auto_pheno_forward.1} parent=39 // pred_fallthru
          _
        %s248 = sand.u32 %s32, 1
        %s249 = scalar_lea.sflag [#allocation3], %s248
        %s250 = sand.u32 %s32, 1
        %s251 = smul.addr %s250, 8
        %s252 = scalar_lea.vmem [#allocation2], %s251
        %p253 = pneg %p45
        %p254 = pneg %p42
        %p255 = pneg %p66
        %p256 = pneg %p63
        %p257 = pneg %p87
        %p258 = pneg %p84
        %p259 = pneg %p108
        %p260 = pneg %p105
        %p261 = pneg %p129
        %p262 = pneg %p126
        %p263 = pneg %p155
        %p264 = pneg %p152
        %s265 = sand.u32 %s142, 1
        %s266 = scalar_lea.sflag [#allocation4], %s265
        %s267 = sand.u32 %s142, 1
        %s268 = smul.addr %s267, 4
        %s269 = scalar_lea.vmem [#allocation5], %s268
        %p270 = pneg %p181
        %p271 = pneg %p178
        %p272 = scmp.lt.s32.totalorder %s24, 7
        %s273 = scalar_select %p272, %s24, 7
        %s274 = smul.addr %s273, 4
        %s275 = scalar_lea.vmem %s6, %s274
        %p276 = scmp.lt.s32.totalorder %s24, 7
        %s277 = scalar_select %p276, %s24, 7
        %s278 = smul.addr %s277, 4
        %s279 = scalar_lea.vmem %s6, %s278
        %v281 = vld [vmem:[%s242] sm:$0xff]
        %v282 = vpack.c.bf16 %v281, %v281
        %v283 = vld [vmem:[%s1] sm:$0xf]
        %v284 = vld [vmem:[%s1 + $0x4] sm:$0xf]
        %v285 = vld [vmem:[%s1 + $0x8] sm:$0xf]
        %v286 = vld [vmem:[%s1 + $0xc] sm:$0xf]
        %v287 = vld [vmem:[%s1 + $0x10] sm:$0xf]
        %v288 = vld [vmem:[%s1 + $0x14] sm:$0xf]
        %v289 = vld [vmem:[%s1 + $0x18] sm:$0xf]
        %v290 = vld [vmem:[%s1 + $0x1c] sm:$0xf]
        %v291 = vld [vmem:[%s2] sm:$0x1]
        %v293 = vperm.slane %v291, 0
        %v303 = vunpack.c.l.b16 %v283
        %v304 = vunpack.c.l.b16 %v284
        %v305 = vunpack.c.l.b16 %v285
        %v306 = vunpack.c.l.b16 %v286
        %v307 = vunpack.c.l.b16 %v287
        %v308 = vunpack.c.l.b16 %v288
        %v309 = vunpack.c.l.b16 %v289
        %v310 = vunpack.c.l.b16 %v290
        %v311 = vpack.c.b16 %v304, %v303
        %v312 = vpack.c.b16 %v306, %v305
        %v313 = vpack.c.b16 %v308, %v307
        %v314 = vpack.c.b16 %v310, %v309
        %vm319 = vcmask 523264
        %v321 = vsel %vm319, %v282, 0
        %323 = vmatpush.bf16.msra.mxu0 0
        %324 = vmatpush.bf16.msra.mxu0 0
        %325 = vmatpush.bf16.msra.mxu0 0
        %326 = vmatpush.bf16.msra.mxu0 0
        %327 = vmatpush.bf16.msra.mxu0 %v314
        %328 = vmatpush.bf16.msra.mxu0 %v313
        %329 = vmatpush.bf16.msra.mxu0 %v312
        %330 = vmatpush.bf16.msra.mxu0 %v311
        %331 = vmatmul.bf16.gmra.mxu0 %v321
        %v332 = vpop.f32.mrf.mxu0
        %v333 = vadd.f32 %v293, %v332
        %v334 = vpop.f32.mrf.mxu0
        %335 = vdwg.mxu0
        %v336 = vxor.u32 %v333, 2147483648
        %v337 = vmul.f32 %v336, 1.442695
        %v338 = vpow.pop %v337
        %v339 = vadd.f32 %v338, 1.0
        %v340 = vrcp.pop %v339
        %v341 = vmul.f32 %v339, %v340
        %v342 = vsub.f32 1.0, %v341
        %v343 = vmul.f32 %v340, %v342
        %v344 = vadd.f32 %v340, %v343
        %vm345 = vweird.f32 %v339
        %vm346 = vweird.f32 %v340
        %vm347 = vmor %vm345, %vm346
        %v348 = vsel %vm347, %v340, %v344
        %v349 = vand.u32 2147483647, %v339
        %vm350 = vcmp.eq.f32.partialorder %v349, 8.507059e+37
        %v351 = vand.u32 %v339, 2147483648
        %v352 = vor.u32 1.1754944e-38, %v351
        %v353 = vsel %vm350, %v352, %v348
        %v354 = vmul.f32 1.0, %v353
        %v355 = vpack.c.bf16 %v354, %v354
        %vm356 = vcmask 60416
        %357 = vst.msk [vmem:[%s279] sm:$0xf] %vm356, %v355
        %v358 = vld [vmem:[%s3] sm:$0xf]
        %v359 = vld [vmem:[%s4] sm:$0x1]
        %v361 = vperm.slane %v359, 0
        %vm363 = vcmask 64512
        %v365 = vsel %vm363, %v355, 0
        %vm367 = vcmask 1043456
        %v369 = vsel %vm367, %v358, 0
        %371 = vmatpush.bf16.msra.mxu0 0
        %372 = vmatpush.bf16.msra.mxu0 0
        %373 = vmatpush.bf16.msra.mxu0 0
        %374 = vmatpush.bf16.msra.mxu0 0
        %375 = vmatpush.bf16.msra.mxu0 0
        %376 = vmatpush.bf16.msra.mxu0 0
        %377 = vmatpush.bf16.msra.mxu0 0
        %378 = vmatpush.bf16.msra.mxu0 %v369
        %379 = vmatmul.bf16.gmra.mxu0 %v365
        %v380 = vpop.f32.mrf.mxu0
        %v381 = vadd.f32 %v361, %v380
        %v382 = vpop.f32.mrf.mxu0
        %383 = vdwg.mxu0
        %v384 = vxor.u32 %v381, 2147483648
        %v385 = vmul.f32 %v384, 1.442695
        %v386 = vpow.pop %v385
        %v387 = vadd.f32 %v386, 1.0
        %v388 = vrcp.pop %v387
        %v389 = vmul.f32 %v387, %v388
        %v390 = vsub.f32 1.0, %v389
        %v391 = vmul.f32 %v388, %v390
        %v392 = vadd.f32 %v388, %v391
        %vm393 = vweird.f32 %v387
        %vm394 = vweird.f32 %v388
        %vm395 = vmor %vm393, %vm394
        %v396 = vsel %vm395, %v388, %v392
        %v397 = vand.u32 2147483647, %v387
        %vm398 = vcmp.eq.f32.partialorder %v397, 8.507059e+37
        %v399 = vand.u32 %v387, 2147483648
        %v400 = vor.u32 1.1754944e-38, %v399
        %v401 = vsel %vm398, %v400, %v396
        %v402 = vmul.f32 1.0, %v401
        %v403 = vpack.c.bf16 %v402, %v402
        %vm404 = vcmask 519168
        %405 = vst.msk [vmem:[%s269] sm:$0xf] %vm404, %v403
        %s406 = sand.u32 %s142, 1
        %s407 = scalar_lea.sflag [#allocation4], %s406
        %s408 = sand.u32 %s142, 1
        %s409 = smul.addr %s408, 4
        %s410 = scalar_lea.vmem [#allocation5], %s409
        %p411 = scmp.lt.s32.totalorder %s24, 7
        %s412 = scalar_select %p411, %s24, 7
        %s413 = smul.addr %s412, 4
        %s414 = scalar_lea.vmem %s6, %s413
        // Predicated region
        $region45: #{auto_pheno_forward.1} parent=39 // pred_check
          %p415 = pneg %p152
        $region46: #{auto_pheno_forward.1} parent=39 // pred_check_branch
          %417 = sbr.rel (%p415) target = $region48
        $region47: #{auto_pheno_forward.1} parent=39 // pred_region
          %419 = vsyncadd %s407, 0
          %s420 = smul.addr %s24, 4
          %s421 = scalar_lea.hbm %s5, %s420
          %s423 = sshll.u32 %s410, 4
          %s424 = int_to_ptr.vmem [resolvable:$true] %s423
          %s425 = sshll.u32 %s421, 4
          %s426 = int_to_ptr.hbm [resolvable:$true] %s425
          %428 = dma.vmem_to_hbm [thread:$0]  %s424, 64, %s426, %s407
        $region48: #{auto_pheno_forward.1} parent=39 // pred_fallthru
          _
        // Predicated region
        $region49: #{auto_pheno_forward.1} parent=39 // pred_check
          %p429 = pneg %p178
        $region50: #{auto_pheno_forward.1} parent=39 // pred_check_branch
          %431 = sbr.rel (%p429) target = $region52
        $region51: #{auto_pheno_forward.1} parent=39 // pred_region
          _
        $region52: #{auto_pheno_forward.1} parent=39 // pred_fallthru
          _
      $region40: #{auto_pheno_forward.1} parent=5 // pred_fallthru
        _
      %p432 = scmp.le.s32.totalorder 2, %s19
      // Predicated region
      $region53: #{auto_pheno_forward.1} parent=5 // pred_check
        %p433 = pneg %p432
      $region54: #{auto_pheno_forward.1} parent=5 // pred_check_branch
        %435 = sbr.rel (%p433) target = $region56
      $region55: #{auto_pheno_forward.1} parent=5 // pred_region
        %s436 = ssub.s32 %s19, 2
        // Predicated region
        $region57: #{auto_pheno_forward.1} parent=55 // pred_check
          %p437 = pneg %p158
        $region58: #{auto_pheno_forward.1} parent=55 // pred_check_branch
          %439 = sbr.rel (%p437) target = $region60
        $region59: #{auto_pheno_forward.1} parent=55 // pred_region
          %s440 = sand.u32 %s143, 1
          %s441 = scalar_lea.sflag [#allocation4], %s440
          %s442 = sand.u32 %s143, 1
          %s443 = smul.addr %s442, 4
          %s444 = scalar_lea.vmem [#allocation5], %s443
          %446 = dma.done %s441, 64
        $region60: #{auto_pheno_forward.1} parent=55 // pred_fallthru
          _
        // Predicated region
        $region61: #{auto_pheno_forward.1} parent=55 // pred_check
          %p447 = pneg %p184
        $region62: #{auto_pheno_forward.1} parent=55 // pred_check_branch
          %449 = sbr.rel (%p447) target = $region64
        $region63: #{auto_pheno_forward.1} parent=55 // pred_region
          %p450 = scmp.lt.s32.totalorder %s25, 7
          %s451 = scalar_select %p450, %s25, 7
          %s452 = smul.addr %s451, 4
          %s453 = scalar_lea.vmem %s6, %s452
        $region64: #{auto_pheno_forward.1} parent=55 // pred_fallthru
          _
      $region56: #{auto_pheno_forward.1} parent=5 // pred_fallthru
        _
    $region6: #{auto_pheno_forward.1} parent=1 // loop_footer
      %s23 = sadd.s32 1, %s19
    $region7: #{auto_pheno_forward.1} parent=1 // loop_footer_branch
      %18 = sbr.rel target = $region3
    $region8: #{auto_pheno_forward.1} parent=1 // loop_exit
      _
    %454 = vsyncpa [#allocation3], 1
    %s455 = scalar_lea.sflag [#allocation3], 1
    %456 = vsyncpa %s455, 1
    %457 = vsyncpa [#allocation4], 1
    %s458 = scalar_lea.sflag [#allocation4], 1
    %459 = vsyncpa %s458, 1

</llo_original>
